<compile_context>
chip_gen: v5e
topology: v5e:2x2
jax: 0.10.0
libtpu: 0.0.40
codegen_flags: <defaults>
</compile_context>

<pallas_src>
import jax
import jax.numpy as jnp
from jax.experimental import pallas as pl
from jax.experimental.pallas import tpu as pltpu  # noqa: F401  (TPU backend)


def linear_sigmoid_kernel(x_ref, w_ref, b_ref, o_ref):
    # x: (M, K), w: (N, K) (PyTorch layout), b: (1, N), o: (M, N).
    # Contract x dim 1 against w dim 1 (i.e. x @ w.T) directly on the MXU —
    # no transpose in the wrapper and no XLU transpose in the kernel.
    y = jax.lax.dot_general(
        x_ref[...],
        w_ref[...],
        dimension_numbers=(((1,), (1,)), ((), ())),
        preferred_element_type=jnp.float32,
    )
    o_ref[...] = jax.nn.sigmoid(y + b_ref[...]).astype(o_ref.dtype)


@jax.jit
def linear_sigmoid(x, w, b):
    """x: (M, K) f32, w: (N, K) f32 (PyTorch Linear layout), b: (N,) f32 -> (M, N)."""
    M, K = x.shape
    N, _ = w.shape
    b2 = b.reshape(1, N)  # metadata-only reshape; no HBM round trip.

    # Entire problem is one tile: grid=(1,), block_shape == full array dims
    # (which waives the (8,128) divisibility requirement). Everything lands in
    # VMEM once; the kernel body runs a single time.
    return pl.pallas_call(
        linear_sigmoid_kernel,
        out_shape=jax.ShapeDtypeStruct((M, N), x.dtype),
        grid=(1,),
        in_specs=[
            pl.BlockSpec((M, K), lambda i: (0, 0)),
            pl.BlockSpec((N, K), lambda i: (0, 0)),
            pl.BlockSpec((1, N), lambda i: (0, 0)),
        ],
        out_specs=pl.BlockSpec((M, N), lambda i: (0, 0)),
    )(x, w, b2)


def reference(x, w, b):
    return jax.nn.sigmoid(x @ w.T + b)


if __name__ == "__main__":
    key = jax.random.PRNGKey(0)
    k_x, k_w, k_b = jax.random.split(key, 3)

    in_features, out_features = 8, 4
    batch = 1

    # Deterministic init mimicking nn.Linear uniform(-1/sqrt(in), 1/sqrt(in)).
    bound = 1.0 / jnp.sqrt(jnp.float32(in_features))
    w = jax.random.uniform(
        k_w, (out_features, in_features), jnp.float32, -bound, bound
    )
    b = jax.random.uniform(k_b, (out_features,), jnp.float32, -bound, bound)

    x2 = jax.random.normal(k_x, (batch, in_features), jnp.float32)

    out = jax.block_until_ready(linear_sigmoid(x2, w, b))

    ref = reference(x2, w, b)
    assert out.shape == (batch, out_features)
    assert jnp.allclose(out, ref, atol=1e-5, rtol=1e-5)

    print("KERNEL_OK")
</pallas_src>

<mosaic_0001>
module attributes {stable_mosaic.version = 11 : i64} {
  func.func @linear_sigmoid_kernel(%arg0: i32, %arg1: memref<1x8xf32, #tpu.memory_space<vmem>>, %arg2: memref<4x8xf32, #tpu.memory_space<vmem>>, %arg3: memref<1x4xf32, #tpu.memory_space<vmem>>, %arg4: memref<1x4xf32, #tpu.memory_space<vmem>>) attributes {dimension_semantics = [#tpu.dimension_semantics<arbitrary>], iteration_bounds = array<i64: 1>, scalar_prefetch = 0 : i64, scratch_operands = 0 : i64, tpu.core_type = #tpu.core_type<tc>, window_params = [{pipeline_mode = #tpu.pipeline_mode<synchronous>, transform_indices = @transform_0, window_bounds = array<i64: 1, 8>}, {pipeline_mode = #tpu.pipeline_mode<synchronous>, transform_indices = @transform_1, window_bounds = array<i64: 4, 8>}, {pipeline_mode = #tpu.pipeline_mode<synchronous>, transform_indices = @transform_2, window_bounds = array<i64: 1, 4>}, {pipeline_mode = #tpu.pipeline_mode<synchronous>, transform_indices = @transform_3, window_bounds = array<i64: 1, 4>}]} {
    %c0 = arith.constant 0 : index
    %c0_0 = arith.constant 0 : index
    %0 = vector.load %arg1[%c0, %c0_0] : memref<1x8xf32, #tpu.memory_space<vmem>>, vector<1x8xf32>
    %c0_1 = arith.constant 0 : index
    %c0_2 = arith.constant 0 : index
    %1 = vector.load %arg2[%c0_1, %c0_2] : memref<4x8xf32, #tpu.memory_space<vmem>>, vector<4x8xf32>
    %cst = arith.constant dense<0.000000e+00> : vector<1x4xf32>
    %2 = tpu.matmul %0, %1, %cst {dimension_numbers = #tpu.dot_dimension_numbers<[1], [1], [0], [0], [0, 0, 1, 0], [], []>} : vector<1x8xf32>, vector<4x8xf32>, vector<1x4xf32> -> vector<1x4xf32>
    %c0_3 = arith.constant 0 : index
    %c0_4 = arith.constant 0 : index
    %3 = vector.load %arg3[%c0_3, %c0_4] : memref<1x4xf32, #tpu.memory_space<vmem>>, vector<1x4xf32>
    %4 = arith.addf %2, %3 : vector<1x4xf32>
    %5 = arith.negf %4 : vector<1x4xf32>
    %6 = math.exp %5 : vector<1x4xf32>
    %cst_5 = arith.constant 1.000000e+00 : f32
    %7 = vector.broadcast %cst_5 : f32 to vector<1x4xf32>
    %8 = arith.addf %7, %6 : vector<1x4xf32>
    %9 = arith.divf %7, %8 : vector<1x4xf32>
    %c0_6 = arith.constant 0 : index
    %c0_7 = arith.constant 0 : index
    %10 = vector.load %arg4[%c0_6, %c0_7] : memref<1x4xf32, #tpu.memory_space<vmem>>, vector<1x4xf32>
    tpu.vector_store %arg4[%c0_6, %c0_7], %9 {strides = array<i32>} : memref<1x4xf32, #tpu.memory_space<vmem>>, vector<1x4xf32>,
    return
  }
  func.func @transform_0(%arg0: i32) -> (i32, i32) {
    %c0_i32 = arith.constant 0 : i32
    %c0_i32_0 = arith.constant 0 : i32
    %c0_i32_1 = arith.constant 0 : i32
    return %c0_i32, %c0_i32_0 : i32, i32
  }
  func.func @transform_1(%arg0: i32) -> (i32, i32) {
    %c0_i32 = arith.constant 0 : i32
    %c0_i32_0 = arith.constant 0 : i32
    %c0_i32_1 = arith.constant 0 : i32
    return %c0_i32, %c0_i32_0 : i32, i32
  }
  func.func @transform_2(%arg0: i32) -> (i32, i32) {
    %c0_i32 = arith.constant 0 : i32
    %c0_i32_0 = arith.constant 0 : i32
    %c0_i32_1 = arith.constant 0 : i32
    return %c0_i32, %c0_i32_0 : i32, i32
  }
  func.func @transform_3(%arg0: i32) -> (i32, i32) {
    %c0_i32 = arith.constant 0 : i32
    %c0_i32_0 = arith.constant 0 : i32
    %c0_i32_1 = arith.constant 0 : i32
    return %c0_i32, %c0_i32_0 : i32, i32
  }
}

</mosaic_0001>

<llo_original>
// kernel: linear_sigmoid.1
$region0: #{linear_sigmoid.1}
  #allocation0 [shape = 'u32[]', space=smem, size = 0x4, offset = 0x4, fixed_abs, tag = 'smem constant byte address 0x4 - core index']
  #allocation1 [shape = 'u32[72,128]{1,0:T(1,128)}', space=vmem, size = 0x9000, scoped, tag = 'internal scratch']
  %s0 = inlined_call_operand.hbm [shape: f32[1,8], index: 0, kind: input, shape index: {}]
  %s1 = inlined_call_operand.hbm [shape: f32[4,8], index: 1, kind: input, shape index: {}]
  %s2 = inlined_call_operand.vmem [shape: f32[1,4], index: 2, kind: input, shape index: {}]
  %s3 = inlined_call_operand.hbm [shape: f32[1,4], index: 3, kind: output, shape index: {}]
  %s4 = sld [smem:[#allocation0]]
  $region30: #{linear_sigmoid.1} parent=0
    _
  %s6 = ssub.s32 1, %s4
  %s7 = scalar_select 0, %s6, %s4
  $region1: #{linear_sigmoid.1} parent=0
    #allocation2 [shape = 'u8[512]{0}', space=vmem, size = 0x400, scoped, tag = 'input window, operand 0, single buffered']
    #allocation3 [shape = 's32[1]{0}', space=sflag, size = 0x4, scoped, tag = 'scoped memory for linear_sigmoid.1']
    #allocation4 [shape = 's32[1]{0}', space=sflag, size = 0x4, scoped, tag = 'scoped memory for linear_sigmoid.1']
    #allocation5 [shape = 'u8[2048]{0}', space=vmem, size = 0x800, scoped, tag = 'input window, operand 1, single buffered']
    #allocation6 [shape = 's32[1]{0}', space=sflag, size = 0x4, scoped, tag = 'scoped memory for linear_sigmoid.1']
    #allocation7 [shape = 'u8[512]{0}', space=vmem, size = 0x400, scoped, tag = 'output window, operand 0, single buffered']
    %8 = vsyncpa [#allocation3], 0
    %9 = vsyncpa [#allocation6], 0
    %10 = vsyncpa [#allocation4], 0
    // Predicated region
    $region2: #{linear_sigmoid.1} parent=1 // pred_check
      _
    $region3: #{linear_sigmoid.1} parent=1 // pred_check_branch
      %12 = sbr.rel (0) target = $region5
    $region4: #{linear_sigmoid.1} parent=1 // pred_region
      %14 = vsyncadd [#allocation3], 0
      %s16 = sshll.u32 %s0, 4
      %s17 = int_to_ptr.hbm [resolvable:$true] %s16
      %s18 = sshll.u32 [#allocation2], 4
      %s19 = int_to_ptr.vmem [resolvable:$true] %s18
      %21 = dma.hbm_to_vmem [thread:$0]  %s17, 16, %s19, [#allocation3]
    $region5: #{linear_sigmoid.1} parent=1 // pred_fallthru
      _
    // Predicated region
    $region6: #{linear_sigmoid.1} parent=1 // pred_check
      _
    $region7: #{linear_sigmoid.1} parent=1 // pred_check_branch
      %23 = sbr.rel (0) target = $region9
    $region8: #{linear_sigmoid.1} parent=1 // pred_region
      %25 = vsyncadd [#allocation6], 0
      %s27 = sshll.u32 %s1, 4
      %s28 = int_to_ptr.hbm [resolvable:$true] %s27
      %s29 = sshll.u32 [#allocation5], 4
      %s30 = int_to_ptr.vmem [resolvable:$true] %s29
      %32 = dma.hbm_to_vmem [thread:$0]  %s28, 64, %s30, [#allocation6]
    $region9: #{linear_sigmoid.1} parent=1 // pred_fallthru
      _
    // Predicated region
    $region10: #{linear_sigmoid.1} parent=1 // pred_check
      _
    $region11: #{linear_sigmoid.1} parent=1 // pred_check_branch
      %34 = sbr.rel (0) target = $region13
    $region12: #{linear_sigmoid.1} parent=1 // pred_region
      _
    $region13: #{linear_sigmoid.1} parent=1 // pred_fallthru
      _
    // Predicated region
    $region14: #{linear_sigmoid.1} parent=1 // pred_check
      _
    $region15: #{linear_sigmoid.1} parent=1 // pred_check_branch
      %36 = sbr.rel (0) target = $region17
    $region16: #{linear_sigmoid.1} parent=1 // pred_region
      %38 = dma.done [#allocation3], 16
    $region17: #{linear_sigmoid.1} parent=1 // pred_fallthru
      _
    // Predicated region
    $region18: #{linear_sigmoid.1} parent=1 // pred_check
      _
    $region19: #{linear_sigmoid.1} parent=1 // pred_check_branch
      %40 = sbr.rel (0) target = $region21
    $region20: #{linear_sigmoid.1} parent=1 // pred_region
      %42 = dma.done [#allocation6], 64
    $region21: #{linear_sigmoid.1} parent=1 // pred_fallthru
      _
    %v43 = vld [vmem:[#allocation2] sm:$0x1]
    %v44 = vld [vmem:[#allocation5] sm:$0xf]
    %v45 = vld [vmem:[%s2] sm:$0x1]
    %vm46 = vcmask 64512
    %v48 = vsel %vm46, %v43, 0
    %v51 = vsel %vm46, %v44, 0
    %53 = vmatpush.xpose.msra.mxu0 0.0
    %54 = vmatpush.xpose.msra.mxu0 0.0
    %55 = vmatpush.xpose.msra.mxu0 0.0
    %56 = vmatpush.xpose.msra.mxu0 0.0
    %57 = vmatpush.xpose.msra.mxu0 0.0
    %58 = vmatpush.xpose.msra.mxu0 0.0
    %59 = vmatpush.xpose.msra.mxu0 0.0
    %60 = vmatpush.xpose.msra.mxu0 0.0
    %61 = vmatpush.xpose.msra.mxu0 0.0
    %62 = vmatpush.xpose.msra.mxu0 0.0
    %63 = vmatpush.xpose.msra.mxu0 0.0
    %64 = vmatpush.xpose.msra.mxu0 0.0
    %65 = vmatpush.xpose.msra.mxu0 0.0
    %66 = vmatpush.xpose.msra.mxu0 0.0
    %67 = vmatpush.xpose.msra.mxu0 0.0
    %68 = vmatpush.xpose.msra.mxu0 %v51
    %69 = vmatmul.f32.gmra.mxu0 %v48
    %v70 = vpop.f32.mrf.mxu0
    %v71 = vadd.f32 %v45, %v70
    %72 = vdwg.mxu0
    %v73 = vxor.u32 %v71, 2147483648
    %v74 = vmul.f32 %v73, 1.442695
    %v75 = vpow.pop %v74
    %v76 = vadd.f32 %v75, 1.0
    %v77 = vrcp.pop %v76
    %v78 = vmul.f32 %v76, %v77
    %v79 = vsub.f32 1.0, %v78
    %v80 = vmul.f32 %v77, %v79
    %v81 = vadd.f32 %v77, %v80
    %vm82 = vweird.f32 %v76
    %vm83 = vweird.f32 %v77
    %vm84 = vmor %vm82, %vm83
    %v85 = vsel %vm84, %v77, %v81
    %v86 = vand.u32 2147483647, %v76
    %vm87 = vcmp.eq.f32.partialorder %v86, 8.507059e+37
    %v88 = vand.u32 %v76, 2147483648
    %v89 = vor.u32 1.1754944e-38, %v88
    %v90 = vsel %vm87, %v89, %v85
    %v91 = vmul.f32 1.0, %v90
    %vm92 = vcmask 24576
    %93 = vst.msk [vmem:[#allocation7] sm:$0x1] %vm92, %v91
    // Predicated region
    $region22: #{linear_sigmoid.1} parent=1 // pred_check
      _
    $region23: #{linear_sigmoid.1} parent=1 // pred_check_branch
      %95 = sbr.rel (0) target = $region25
    $region24: #{linear_sigmoid.1} parent=1 // pred_region
      %97 = vsyncadd [#allocation4], 0
      %s99 = sshll.u32 [#allocation7], 4
      %s100 = int_to_ptr.vmem [resolvable:$true] %s99
      %s101 = sshll.u32 %s3, 4
      %s102 = int_to_ptr.hbm [resolvable:$true] %s101
      %104 = dma.vmem_to_hbm [thread:$0]  %s100, 16, %s102, [#allocation4]
    $region25: #{linear_sigmoid.1} parent=1 // pred_fallthru
      _
    // Predicated region
    $region26: #{linear_sigmoid.1} parent=1 // pred_check
      _
    $region27: #{linear_sigmoid.1} parent=1 // pred_check_branch
      %106 = sbr.rel (0) target = $region29
    $region28: #{linear_sigmoid.1} parent=1 // pred_region
      %108 = dma.done [#allocation4], 16
    $region29: #{linear_sigmoid.1} parent=1 // pred_fallthru
      _
    %109 = vsyncpa [#allocation3], 1
    %110 = vsyncpa [#allocation6], 1
    %111 = vsyncpa [#allocation4], 1

</llo_original>
